<compile_context>
chip_gen: v6e
topology: v6e:2x2x1
jax: 0.10.0
libtpu: 0.0.40
codegen_flags: <defaults>
</compile_context>

<pallas_src>
import functools

import jax
import jax.numpy as jnp
import numpy as np
from jax.experimental import pallas as pl
from jax.experimental.pallas import tpu as pltpu

_NEG_INF = -1e30
_LANE = 128


def _round_up(x, m):
    return ((x + m - 1) // m) * m


def _reinforce_step_kernel(x_ref, g_ref, w1_ref, b1_ref, w2_ref, b2_ref,
                           out_ref, *, use_bf16):
    mm_dtype = jnp.bfloat16 if use_bf16 else jnp.float32

    # ---- policy network: Linear -> ReLU -> Linear (MXU, f32 accumulate) ----
    x = x_ref[...].astype(mm_dtype)
    h = jnp.dot(x, w1_ref[...].astype(mm_dtype),
                preferred_element_type=jnp.float32) + b1_ref[...]
    h = jnp.maximum(h, 0.0)
    logits = jnp.dot(h.astype(mm_dtype), w2_ref[...].astype(mm_dtype),
                     preferred_element_type=jnp.float32) + b2_ref[...]

    # ---- log-softmax; padded fake actions carry bias -1e30 -> exp() == 0 ----
    m = jnp.max(logits, axis=-1, keepdims=True)
    z = logits - m
    lse = jnp.log(jnp.sum(jnp.exp(z), axis=-1, keepdims=True))
    log_probs = z - lse                                       # [TB, A_pad]

    # ---- Categorical sample via Gumbel-max (noise precomputed host-side) ----
    # argmax(logits + g) == argmax(z + g); padded actions sit at ~-1e30.
    perturbed = z + g_ref[...]
    pmax = jnp.max(perturbed, axis=-1, keepdims=True)
    ids = jax.lax.broadcasted_iota(jnp.int32, perturbed.shape, 1)
    a_pad = perturbed.shape[-1]
    action = jnp.min(jnp.where(perturbed == pmax, ids, a_pad),
                     axis=-1, keepdims=True)                  # [TB, 1] int32

    # ---- gather log_prob of the sampled action ----
    logp = jnp.sum(jnp.where(ids == action, log_probs, 0.0),
                   axis=-1, keepdims=True)                    # [TB, 1] f32

    # packed output: col 0 = action (small int, exact in f32), col 1 = log_prob
    out_ref[:, 0:1] = action.astype(jnp.float32)
    out_ref[:, 1:2] = logp


def pad_policy_params(w1, b1, w2, b2, lane=_LANE):
    """Pad hidden / action dims to multiples of 128 once, outside the kernel.

    Zero pads for weights / hidden bias; -1e30 bias for padded (fake) actions
    so the softmax and the Gumbel-max sample are unchanged.
    """
    D, H = w1.shape
    H2, A = w2.shape
    assert H == H2
    Hp, Ap = _round_up(H, lane), _round_up(A, lane)
    w1p = jnp.zeros((D, Hp), w1.dtype).at[:, :H].set(w1)
    b1p = jnp.zeros((1, Hp), b1.dtype).at[:, :H].set(jnp.reshape(b1, (1, H)))
    w2p = jnp.zeros((Hp, Ap), w2.dtype).at[:H, :A].set(w2)
    b2p = jnp.full((1, Ap), _NEG_INF, b2.dtype).at[:, :A].set(
        jnp.reshape(b2, (1, A)))
    return w1p, b1p, w2p, b2p


def reinforce_step(state, gumbel, w1p, b1p, w2p, b2p, *,
                   block_b=128, use_bf16=True):
    """Fused policy step.

    Args:
      state : [B, D] f32 observations.
      gumbel: [B, A_pad] f32 Gumbel(0,1) noise (one fresh draw per step).
      w1p/b1p/w2p/b2p: lane-padded policy weights from pad_policy_params.
    Returns:
      (action [B] int32, log_prob [B] float32)  — same as the torch module.
    """
    B, D = state.shape
    Hp = w1p.shape[1]
    Ap = w2p.shape[1]
    assert gumbel.shape == (B, Ap)
    block_b = min(block_b, B)
    assert B % block_b == 0 and block_b % 8 == 0
    grid = (B // block_b,)

    kernel = functools.partial(_reinforce_step_kernel, use_bf16=use_bf16)
    packed = pl.pallas_call(
        kernel,
        out_shape=jax.ShapeDtypeStruct((B, 2), jnp.float32),
        grid=grid,
        in_specs=[
            pl.BlockSpec((block_b, D), lambda i: (i, 0)),    # state tile
            pl.BlockSpec((block_b, Ap), lambda i: (i, 0)),   # gumbel tile
            pl.BlockSpec((D, Hp), lambda i: (0, 0)),         # w1 (resident)
            pl.BlockSpec((1, Hp), lambda i: (0, 0)),         # b1
            pl.BlockSpec((Hp, Ap), lambda i: (0, 0)),        # w2
            pl.BlockSpec((1, Ap), lambda i: (0, 0)),         # b2
        ],
        out_specs=pl.BlockSpec((block_b, 2), lambda i: (i, 0)),
        compiler_params=pltpu.CompilerParams(
            # batch-tile axis is independent -> shard across v7x's 2 TCs
            dimension_semantics=("parallel",)),
    )(state, gumbel, w1p, b1p, w2p, b2p)

    action = packed[:, 0].astype(jnp.int32)
    log_prob = packed[:, 1]
    return action, log_prob


if __name__ == "__main__":
    # Many envs per call (amortizes dispatch), >=128-row matmul tiles.
    B, D, H, A = 256, 32, 64, 16

    key = jax.random.PRNGKey(0)
    k_x, k_w1, k_b1, k_w2, k_b2, k_g = jax.random.split(key, 6)

    state = jax.random.normal(k_x, (B, D), dtype=jnp.float32)

    # torch.nn.Linear-style init: U(-1/sqrt(fan_in), 1/sqrt(fan_in))
    lim1 = 1.0 / np.sqrt(D)
    lim2 = 1.0 / np.sqrt(H)
    w1 = jax.random.uniform(k_w1, (D, H), jnp.float32, -lim1, lim1)
    b1 = jax.random.uniform(k_b1, (H,), jnp.float32, -lim1, lim1)
    w2 = jax.random.uniform(k_w2, (H, A), jnp.float32, -lim2, lim2)
    b2 = jax.random.uniform(k_b2, (A,), jnp.float32, -lim2, lim2)

    w1p, b1p, w2p, b2p = pad_policy_params(w1, b1, w2, b2)
    Ap = w2p.shape[1]
    # Fresh Gumbel noise; the caller must re-draw this every environment step.
    gumbel = jax.random.gumbel(k_g, (B, Ap), dtype=jnp.float32)

    # ---------- references ----------
    # full-f32 reference of the policy head
    h_f32 = jnp.maximum(state @ w1 + b1, 0.0)
    logits_f32 = h_f32 @ w2 + b2
    logsm_f32 = jax.nn.log_softmax(logits_f32, axis=-1)

    # bf16-matched reference (same operand casts as the kernel's default path)
    bf = jnp.bfloat16
    h_bf = jnp.maximum(
        jnp.dot(state.astype(bf), w1.astype(bf),
                preferred_element_type=jnp.float32) + b1, 0.0)
    logits_bf = jnp.dot(h_bf.astype(bf), w2.astype(bf),
                        preferred_element_type=jnp.float32) + b2
    logsm_bf = jax.nn.log_softmax(logits_bf, axis=-1)

    # ---------- default path: bf16 MXU operands, f32 accumulate ----------
    step_bf16 = jax.jit(functools.partial(reinforce_step, use_bf16=True))
    action, log_prob = jax.block_until_ready(
        step_bf16(state, gumbel, w1p, b1p, w2p, b2p))

    assert action.shape == (B,) and action.dtype == jnp.int32
    assert log_prob.shape == (B,) and log_prob.dtype == jnp.float32
    assert bool(jnp.all((action >= 0) & (action < A)))

    ref_bf = jnp.take_along_axis(logsm_bf, action[:, None], axis=-1)[:, 0]
    ref_f32 = jnp.take_along_axis(logsm_f32, action[:, None], axis=-1)[:, 0]
    np.testing.assert_allclose(np.asarray(log_prob), np.asarray(ref_bf),
                               rtol=1e-2, atol=1e-2)
    np.testing.assert_allclose(np.asarray(log_prob), np.asarray(ref_f32),
                               rtol=5e-2, atol=5e-2)

    # ---------- strict f32 matmul path ----------
    step_f32 = jax.jit(functools.partial(reinforce_step, use_bf16=False))
    action32, log_prob32 = jax.block_until_ready(
        step_f32(state, gumbel, w1p, b1p, w2p, b2p))
    assert bool(jnp.all((action32 >= 0) & (action32 < A)))
    ref32 = jnp.take_along_axis(logsm_f32, action32[:, None], axis=-1)[:, 0]
    np.testing.assert_allclose(np.asarray(log_prob32), np.asarray(ref32),
                               rtol=1e-2, atol=1e-2)

    print("KERNEL_OK")
</pallas_src>

<mosaic_0001>
module attributes {stable_mosaic.version = 11 : i64} {
  func.func @_reinforce_step_kernel(%arg0: i32, %arg1: memref<128x32xf32, #tpu.memory_space<vmem>>, %arg2: memref<128x128xf32, #tpu.memory_space<vmem>>, %arg3: memref<32x128xf32, #tpu.memory_space<vmem>>, %arg4: memref<1x128xf32, #tpu.memory_space<vmem>>, %arg5: memref<128x128xf32, #tpu.memory_space<vmem>>, %arg6: memref<1x128xf32, #tpu.memory_space<vmem>>, %arg7: memref<128x2xf32, #tpu.memory_space<vmem>>) attributes {dimension_semantics = [#tpu.dimension_semantics<parallel>], iteration_bounds = array<i64: 2>, scalar_prefetch = 0 : i64, scratch_operands = 0 : i64, tpu.core_type = #tpu.core_type<tc>, window_params = [{transform_indices = @transform_0, window_bounds = array<i64: 128, 32>}, {transform_indices = @transform_1, window_bounds = array<i64: 128, 128>}, {pipeline_mode = #tpu.pipeline_mode<synchronous>, transform_indices = @transform_2, window_bounds = array<i64: 32, 128>}, {pipeline_mode = #tpu.pipeline_mode<synchronous>, transform_indices = @transform_3, window_bounds = array<i64: 1, 128>}, {pipeline_mode = #tpu.pipeline_mode<synchronous>, transform_indices = @transform_4, window_bounds = array<i64: 128, 128>}, {pipeline_mode = #tpu.pipeline_mode<synchronous>, transform_indices = @transform_5, window_bounds = array<i64: 1, 128>}, {transform_indices = @transform_6, window_bounds = array<i64: 128, 2>}]} {
    %c0 = arith.constant 0 : index
    %c0_0 = arith.constant 0 : index
    %0 = vector.load %arg1[%c0, %c0_0] : memref<128x32xf32, #tpu.memory_space<vmem>>, vector<128x32xf32>
    %1 = arith.truncf %0 : vector<128x32xf32> to vector<128x32xbf16>
    %c0_1 = arith.constant 0 : index
    %c0_2 = arith.constant 0 : index
    %2 = vector.load %arg3[%c0_1, %c0_2] : memref<32x128xf32, #tpu.memory_space<vmem>>, vector<32x128xf32>
    %3 = arith.truncf %2 : vector<32x128xf32> to vector<32x128xbf16>
    %cst = arith.constant dense<0.000000e+00> : vector<128x128xf32>
    %4 = tpu.matmul %1, %3, %cst {dimension_numbers = #tpu.dot_dimension_numbers<[1], [0], [0], [1], [0, 0, 1, 1], [], []>} : vector<128x32xbf16>, vector<32x128xbf16>, vector<128x128xf32> -> vector<128x128xf32>
    %c0_3 = arith.constant 0 : index
    %c0_4 = arith.constant 0 : index
    %5 = vector.load %arg4[%c0_3, %c0_4] : memref<1x128xf32, #tpu.memory_space<vmem>>, vector<1x128xf32>
    %6 = vector.broadcast %5 : vector<1x128xf32> to vector<128x128xf32>
    %7 = arith.addf %4, %6 : vector<128x128xf32>
    %cst_5 = arith.constant 0.000000e+00 : f32
    %8 = vector.broadcast %cst_5 : f32 to vector<128x128xf32>
    %9 = arith.maximumf %7, %8 : vector<128x128xf32>
    %10 = arith.truncf %9 : vector<128x128xf32> to vector<128x128xbf16>
    %c0_6 = arith.constant 0 : index
    %c0_7 = arith.constant 0 : index
    %11 = vector.load %arg5[%c0_6, %c0_7] : memref<128x128xf32, #tpu.memory_space<vmem>>, vector<128x128xf32>
    %12 = arith.truncf %11 : vector<128x128xf32> to vector<128x128xbf16>
    %cst_8 = arith.constant dense<0.000000e+00> : vector<128x128xf32>
    %13 = tpu.matmul %10, %12, %cst_8 {dimension_numbers = #tpu.dot_dimension_numbers<[1], [0], [0], [1], [0, 0, 1, 1], [], []>} : vector<128x128xbf16>, vector<128x128xbf16>, vector<128x128xf32> -> vector<128x128xf32>
    %c0_9 = arith.constant 0 : index
    %c0_10 = arith.constant 0 : index
    %14 = vector.load %arg6[%c0_9, %c0_10] : memref<1x128xf32, #tpu.memory_space<vmem>>, vector<1x128xf32>
    %15 = vector.broadcast %14 : vector<1x128xf32> to vector<128x128xf32>
    %16 = arith.addf %13, %15 : vector<128x128xf32>
    %cst_11 = arith.constant dense<0xFF800000> : vector<128xf32>
    %17 = vector.multi_reduction <maximumf>, %16, %cst_11 [1] : vector<128x128xf32> to vector<128xf32>
    %18 = vector.shape_cast %17 : vector<128xf32> to vector<128x1xf32>
    %19 = vector.broadcast %18 : vector<128x1xf32> to vector<128x128xf32>
    %20 = arith.subf %16, %19 : vector<128x128xf32>
    %21 = math.exp %20 : vector<128x128xf32>
    %cst_12 = arith.constant dense<0.000000e+00> : vector<128xf32>
    %22 = vector.multi_reduction <add>, %21, %cst_12 [1] : vector<128x128xf32> to vector<128xf32>
    %23 = vector.shape_cast %22 : vector<128xf32> to vector<128x1xf32>
    %24 = math.log %23 : vector<128x1xf32>
    %25 = vector.broadcast %24 : vector<128x1xf32> to vector<128x128xf32>
    %26 = arith.subf %20, %25 : vector<128x128xf32>
    %c0_13 = arith.constant 0 : index
    %c0_14 = arith.constant 0 : index
    %27 = vector.load %arg2[%c0_13, %c0_14] : memref<128x128xf32, #tpu.memory_space<vmem>>, vector<128x128xf32>
    %28 = arith.addf %20, %27 : vector<128x128xf32>
    %cst_15 = arith.constant dense<0xFF800000> : vector<128xf32>
    %29 = vector.multi_reduction <maximumf>, %28, %cst_15 [1] : vector<128x128xf32> to vector<128xf32>
    %30 = vector.shape_cast %29 : vector<128xf32> to vector<128x1xf32>
    %31 = tpu.iota {dimensions = array<i32: 1>} : vector<128x128xi32>
    %32 = vector.broadcast %30 : vector<128x1xf32> to vector<128x128xf32>
    %33 = arith.cmpf oeq, %28, %32 : vector<128x128xf32>
    %c128_i32 = arith.constant 128 : i32
    %34 = vector.broadcast %c128_i32 : i32 to vector<128x128xi32>
    %35 = arith.select %33, %31, %34 : vector<128x128xi1>, vector<128x128xi32>
    %cst_16 = arith.constant dense<2147483647> : vector<128xi32>
    %36 = vector.multi_reduction <minsi>, %35, %cst_16 [1] : vector<128x128xi32> to vector<128xi32>
    %37 = vector.shape_cast %36 : vector<128xi32> to vector<128x1xi32>
    %38 = vector.broadcast %37 : vector<128x1xi32> to vector<128x128xi32>
    %39 = arith.cmpi eq, %31, %38 : vector<128x128xi32>
    %cst_17 = arith.constant 0.000000e+00 : f32
    %40 = vector.broadcast %cst_17 : f32 to vector<128x128xf32>
    %41 = arith.select %39, %26, %40 : vector<128x128xi1>, vector<128x128xf32>
    %cst_18 = arith.constant dense<0.000000e+00> : vector<128xf32>
    %42 = vector.multi_reduction <add>, %41, %cst_18 [1] : vector<128x128xf32> to vector<128xf32>
    %43 = vector.shape_cast %42 : vector<128xf32> to vector<128x1xf32>
    %44 = arith.sitofp %37 : vector<128x1xi32> to vector<128x1xf32>
    %c0_19 = arith.constant 0 : index
    %c0_20 = arith.constant 0 : index
    %45 = vector.load %arg7[%c0_19, %c0_20] : memref<128x2xf32, #tpu.memory_space<vmem>>, vector<128x1xf32>
    tpu.vector_store %arg7[%c0_19, %c0_20], %44 {strides = array<i32>} : memref<128x2xf32, #tpu.memory_space<vmem>>, vector<128x1xf32>,
    %c0_21 = arith.constant 0 : index
    %c1 = arith.constant 1 : index
    %46 = vector.load %arg7[%c0_21, %c1] : memref<128x2xf32, #tpu.memory_space<vmem>>, vector<128x1xf32>
    tpu.vector_store %arg7[%c0_21, %c1], %43 {strides = array<i32>} : memref<128x2xf32, #tpu.memory_space<vmem>>, vector<128x1xf32>,
    return
  }
  func.func @transform_0(%arg0: i32) -> (i32, i32) {
    %c0_i32 = arith.constant 0 : i32
    %c0_i32_0 = arith.constant 0 : i32
    return %arg0, %c0_i32 : i32, i32
  }
  func.func @transform_1(%arg0: i32) -> (i32, i32) {
    %c0_i32 = arith.constant 0 : i32
    %c0_i32_0 = arith.constant 0 : i32
    return %arg0, %c0_i32 : i32, i32
  }
  func.func @transform_2(%arg0: i32) -> (i32, i32) {
    %c0_i32 = arith.constant 0 : i32
    %c0_i32_0 = arith.constant 0 : i32
    %c0_i32_1 = arith.constant 0 : i32
    return %c0_i32, %c0_i32_0 : i32, i32
  }
  func.func @transform_3(%arg0: i32) -> (i32, i32) {
    %c0_i32 = arith.constant 0 : i32
    %c0_i32_0 = arith.constant 0 : i32
    %c0_i32_1 = arith.constant 0 : i32
    return %c0_i32, %c0_i32_0 : i32, i32
  }
  func.func @transform_4(%arg0: i32) -> (i32, i32) {
    %c0_i32 = arith.constant 0 : i32
    %c0_i32_0 = arith.constant 0 : i32
    %c0_i32_1 = arith.constant 0 : i32
    return %c0_i32, %c0_i32_0 : i32, i32
  }
  func.func @transform_5(%arg0: i32) -> (i32, i32) {
    %c0_i32 = arith.constant 0 : i32
    %c0_i32_0 = arith.constant 0 : i32
    %c0_i32_1 = arith.constant 0 : i32
    return %c0_i32, %c0_i32_0 : i32, i32
  }
  func.func @transform_6(%arg0: i32) -> (i32, i32) {
    %c0_i32 = arith.constant 0 : i32
    %c0_i32_0 = arith.constant 0 : i32
    return %arg0, %c0_i32 : i32, i32
  }
}

</mosaic_0001>

<llo_original>
// kernel: reinforce_step.1
$region0: #{reinforce_step.1}
  #allocation0 [shape = 'u32[]', space=smem, size = 0x4, offset = 0x4, fixed_abs, tag = 'smem constant byte address 0x4 - core index']
  #allocation1 [shape = 'u32[144,128]{1,0:T(1,128)}', space=vmem, size = 0x12000, scoped, tag = 'internal scratch']
  %s0 = inlined_call_operand.vmem [shape: f32[256,32], index: 0, kind: input, shape index: {}]
  %s1 = inlined_call_operand.vmem [shape: f32[256,128], index: 1, kind: input, shape index: {}]
  %s2 = inlined_call_operand.vmem [shape: f32[32,128], index: 2, kind: input, shape index: {}]
  %s3 = inlined_call_operand.vmem [shape: f32[1,128], index: 3, kind: input, shape index: {}]
  %s4 = inlined_call_operand.hbm [shape: f32[128,128], index: 4, kind: input, shape index: {}]
  %s5 = inlined_call_operand.vmem [shape: f32[1,128], index: 5, kind: input, shape index: {}]
  %s6 = inlined_call_operand.vmem [shape: f32[256,2], index: 6, kind: output, shape index: {}]
  %s7 = sld [smem:[#allocation0]]
  $region61: #{reinforce_step.1} parent=0
    _
  %s9 = ssub.s32 1, %s7
  %s10 = scalar_select 0, %s9, %s7
  $region1: #{reinforce_step.1} parent=0
    #allocation2 [shape = 'u8[65536]{0}', space=vmem, size = 0x10000, scoped, tag = 'input window, operand 4, single buffered']
    #allocation3 [shape = 's32[2]{0}', space=sflag, size = 0x8, scoped, tag = 'scoped memory for reinforce_step.1']
    %11 = vsyncpa [#allocation3], 0
    loop: start=0, step=1, limit=4
    $region2: #{reinforce_step.1} parent=1 // loop_pre_header
      _
    $region3: #{reinforce_step.1} parent=1 // loop_header
      %s13 = sphi 0, %s17
      %p14 = scmp.ge.s32.totalorder %s13, 4
      %s23 = sphi 0, %s25
      %s26 = sphi 0, %s23
      %s27 = sphi 0, %s26
      %s43 = sphi 0, %s27
      %s49 = sphi 0, %s51
      %s52 = sphi 0, %s49
      %s53 = sphi 0, %s52
      %s69 = sphi 0, %s53
      %s73 = sphi 0, %s73
      %s75 = sphi 0, %s73
      %s76 = sphi 0, %s75
      %s90 = sphi 0, %s76
      %s94 = sphi 0, %s94
      %s96 = sphi 0, %s94
      %s97 = sphi 0, %s96
      %s111 = sphi 0, %s97
      %s115 = sphi 0, %s115
      %s117 = sphi 0, %s115
      %s118 = sphi 0, %s117
      %s132 = sphi 0, %s118
      %s136 = sphi 0, %s136
      %s138 = sphi 0, %s136
      %s139 = sphi 0, %s138
      %s153 = sphi 0, %s139
      %s159 = sphi 0, %s161
      %s162 = sphi 0, %s159
      %s163 = sphi 0, %s162
      %s179 = sphi 0, %s163
    $region4: #{reinforce_step.1} parent=1 // loop_header_branch
      %16 = sbr.rel (%p14) target = $region8
    $region5: #{reinforce_step.1} parent=1 // loop_body
      %s18 = ssub.s32 %s13, 1
      %s19 = ssub.s32 %s13, 2
      %s20 = sadd.s32 %s13, 1
      %s21 = ssub.s32 %s13, %s20
      %p22 = scmp.eq.s32.totalorder %s21, 0
      %s24 = sadd.s32 %s23, 1
      %s25 = scalar_select %p22, %s23, %s24
      %p28 = pneg %p22
      %p29 = scmp.eq.s32.totalorder %s13, 1
      %p30 = por %p28, %p29
      %p31 = scmp.ne.s32.totalorder %s23, %s26
      %p32 = scmp.eq.s32.totalorder %s13, 0
      %p33 = por %p31, %p32
      %p34 = scmp.ne.s32.totalorder %s23, %s26
      %p35 = scmp.eq.s32.totalorder %s18, 1
      %p36 = por %p34, %p35
      %p37 = scmp.ne.s32.totalorder %s26, %s27
      %p38 = scmp.eq.s32.totalorder %s18, 0
      %p39 = por %p37, %p38
      %p40 = scmp.ne.s32.totalorder %s26, %s27
      %p41 = scmp.eq.s32.totalorder %s19, 1
      %p42 = por %p40, %p41
      %p44 = scmp.ne.s32.totalorder %s27, %s43
      %p45 = scmp.eq.s32.totalorder %s19, 0
      %p46 = por %p44, %p45
      %s47 = ssub.s32 %s13, %s20
      %p48 = scmp.eq.s32.totalorder %s47, 0
      %s50 = sadd.s32 %s49, 1
      %s51 = scalar_select %p48, %s49, %s50
      %p54 = pneg %p48
      %p55 = scmp.eq.s32.totalorder %s13, 1
      %p56 = por %p54, %p55
      %p57 = scmp.ne.s32.totalorder %s49, %s52
      %p58 = scmp.eq.s32.totalorder %s13, 0
      %p59 = por %p57, %p58
      %p60 = scmp.ne.s32.totalorder %s49, %s52
      %p61 = scmp.eq.s32.totalorder %s18, 1
      %p62 = por %p60, %p61
      %p63 = scmp.ne.s32.totalorder %s52, %s53
      %p64 = scmp.eq.s32.totalorder %s18, 0
      %p65 = por %p63, %p64
      %p66 = scmp.ne.s32.totalorder %s52, %s53
      %p67 = scmp.eq.s32.totalorder %s19, 1
      %p68 = por %p66, %p67
      %p70 = scmp.ne.s32.totalorder %s53, %s69
      %p71 = scmp.eq.s32.totalorder %s19, 0
      %p72 = por %p70, %p71
      %s74 = sadd.s32 %s73, 1
      %p77 = scmp.eq.s32.totalorder %s13, 1
      %p78 = scmp.ne.s32.totalorder %s73, %s75
      %p79 = scmp.eq.s32.totalorder %s13, 0
      %p80 = por %p78, %p79
      %p81 = scmp.ne.s32.totalorder %s73, %s75
      %p82 = scmp.eq.s32.totalorder %s18, 1
      %p83 = por %p81, %p82
      %p84 = scmp.ne.s32.totalorder %s75, %s76
      %p85 = scmp.eq.s32.totalorder %s18, 0
      %p86 = por %p84, %p85
      %p87 = scmp.ne.s32.totalorder %s75, %s76
      %p88 = scmp.eq.s32.totalorder %s19, 1
      %p89 = por %p87, %p88
      %p91 = scmp.ne.s32.totalorder %s76, %s90
      %p92 = scmp.eq.s32.totalorder %s19, 0
      %p93 = por %p91, %p92
      %s95 = sadd.s32 %s94, 1
      %p98 = scmp.eq.s32.totalorder %s13, 1
      %p99 = scmp.ne.s32.totalorder %s94, %s96
      %p100 = scmp.eq.s32.totalorder %s13, 0
      %p101 = por %p99, %p100
      %p102 = scmp.ne.s32.totalorder %s94, %s96
      %p103 = scmp.eq.s32.totalorder %s18, 1
      %p104 = por %p102, %p103
      %p105 = scmp.ne.s32.totalorder %s96, %s97
      %p106 = scmp.eq.s32.totalorder %s18, 0
      %p107 = por %p105, %p106
      %p108 = scmp.ne.s32.totalorder %s96, %s97
      %p109 = scmp.eq.s32.totalorder %s19, 1
      %p110 = por %p108, %p109
      %p112 = scmp.ne.s32.totalorder %s97, %s111
      %p113 = scmp.eq.s32.totalorder %s19, 0
      %p114 = por %p112, %p113
      %s116 = sadd.s32 %s115, 1
      %p119 = scmp.eq.s32.totalorder %s13, 1
      %p120 = scmp.ne.s32.totalorder %s115, %s117
      %p121 = scmp.eq.s32.totalorder %s13, 0
      %p122 = por %p120, %p121
      %p123 = scmp.ne.s32.totalorder %s115, %s117
      %p124 = scmp.eq.s32.totalorder %s18, 1
      %p125 = por %p123, %p124
      %p126 = scmp.ne.s32.totalorder %s117, %s118
      %p127 = scmp.eq.s32.totalorder %s18, 0
      %p128 = por %p126, %p127
      %p129 = scmp.ne.s32.totalorder %s117, %s118
      %p130 = scmp.eq.s32.totalorder %s19, 1
      %p131 = por %p129, %p130
      %p133 = scmp.ne.s32.totalorder %s118, %s132
      %p134 = scmp.eq.s32.totalorder %s19, 0
      %p135 = por %p133, %p134
      %s137 = sadd.s32 %s136, 1
      %p140 = scmp.eq.s32.totalorder %s13, 1
      %p141 = scmp.ne.s32.totalorder %s136, %s138
      %p142 = scmp.eq.s32.totalorder %s13, 0
      %p143 = por %p141, %p142
      %p144 = scmp.ne.s32.totalorder %s136, %s138
      %p145 = scmp.eq.s32.totalorder %s18, 1
      %p146 = por %p144, %p145
      %p147 = scmp.ne.s32.totalorder %s138, %s139
      %p148 = scmp.eq.s32.totalorder %s18, 0
      %p149 = por %p147, %p148
      %p150 = scmp.ne.s32.totalorder %s138, %s139
      %p151 = scmp.eq.s32.totalorder %s19, 1
      %p152 = por %p150, %p151
      %p154 = scmp.ne.s32.totalorder %s139, %s153
      %p155 = scmp.eq.s32.totalorder %s19, 0
      %p156 = por %p154, %p155
      %s157 = ssub.s32 %s13, %s20
      %p158 = scmp.eq.s32.totalorder %s157, 0
      %s160 = sadd.s32 %s159, 1
      %s161 = scalar_select %p158, %s159, %s160
      %p164 = pneg %p158
      %p165 = scmp.eq.s32.totalorder %s13, 1
      %p166 = por %p164, %p165
      %p167 = scmp.ne.s32.totalorder %s159, %s162
      %p168 = scmp.eq.s32.totalorder %s13, 0
      %p169 = por %p167, %p168
      %p170 = scmp.ne.s32.totalorder %s159, %s162
      %p171 = scmp.eq.s32.totalorder %s18, 1
      %p172 = por %p170, %p171
      %p173 = scmp.ne.s32.totalorder %s162, %s163
      %p174 = scmp.eq.s32.totalorder %s18, 0
      %p175 = por %p173, %p174
      %p176 = scmp.ne.s32.totalorder %s162, %s163
      %p177 = scmp.eq.s32.totalorder %s19, 1
      %p178 = por %p176, %p177
      %p180 = scmp.ne.s32.totalorder %s163, %s179
      %p181 = scmp.eq.s32.totalorder %s19, 0
      %p182 = por %p180, %p181
      %p183 = scmp.le.s32.totalorder 1, %s13
      %p184 = scmp.lt.s32.totalorder %s13, 3
      %p185 = pnand %p183, %p184
      %p186 = pneg %p185
      // Predicated region
      $region9: #{reinforce_step.1} parent=5 // pred_check
        _
      $region10: #{reinforce_step.1} parent=5 // pred_check_branch
        %188 = sbr.rel (%p185) target = $region12
      $region11: #{reinforce_step.1} parent=5 // pred_region
        %s189 = ssub.s32 %s13, 1
        // Predicated region
        $region13: #{reinforce_step.1} parent=11 // pred_check
          %p190 = pneg %p86
        $region14: #{reinforce_step.1} parent=11 // pred_check_branch
          %192 = sbr.rel (%p190) target = $region16
        $region15: #{reinforce_step.1} parent=11 // pred_region
          _
        $region16: #{reinforce_step.1} parent=11 // pred_fallthru
          _
        // Predicated region
        $region17: #{reinforce_step.1} parent=11 // pred_check
          %p193 = pneg %p107
        $region18: #{reinforce_step.1} parent=11 // pred_check_branch
          %195 = sbr.rel (%p193) target = $region20
        $region19: #{reinforce_step.1} parent=11 // pred_region
          _
        $region20: #{reinforce_step.1} parent=11 // pred_fallthru
          _
        // Predicated region
        $region21: #{reinforce_step.1} parent=11 // pred_check
          %p196 = pneg %p128
        $region22: #{reinforce_step.1} parent=11 // pred_check_branch
          %198 = sbr.rel (%p196) target = $region24
        $region23: #{reinforce_step.1} parent=11 // pred_region
          %s200 = ssub.s32 2048, 2048
          %201 = vsyncadd [#allocation3], %s200
          %s202 = sshll.u32 [#allocation2], 4
          %s203 = int_to_ptr.vmem [resolvable:$true] %s202
          %208 = dma.hbm_to_vmem [thread:$0]  %s4, 2048, %s203, [#allocation3], 128, 128, 8
        $region24: #{reinforce_step.1} parent=11 // pred_fallthru
          _
        // Predicated region
        $region25: #{reinforce_step.1} parent=11 // pred_check
          %p209 = pneg %p149
        $region26: #{reinforce_step.1} parent=11 // pred_check_branch
          %211 = sbr.rel (%p209) target = $region28
        $region27: #{reinforce_step.1} parent=11 // pred_region
          _
        $region28: #{reinforce_step.1} parent=11 // pred_fallthru
          _
      $region12: #{reinforce_step.1} parent=5 // pred_fallthru
        _
      %p212 = scmp.lt.s32.totalorder %s13, 2
      // Predicated region
      $region29: #{reinforce_step.1} parent=5 // pred_check
        %p213 = pneg %p212
      $region30: #{reinforce_step.1} parent=5 // pred_check_branch
        %215 = sbr.rel (%p213) target = $region32
      $region31: #{reinforce_step.1} parent=5 // pred_region
        // Predicated region
        $region33: #{reinforce_step.1} parent=31 // pred_check
          %p216 = pneg %p33
        $region34: #{reinforce_step.1} parent=31 // pred_check_branch
          %218 = sbr.rel (%p216) target = $region36
        $region35: #{reinforce_step.1} parent=31 // pred_region
          %s219 = smul.u32 16, %s13
          %p220 = scmp.lt.s32.totalorder %s219, 31
          %s221 = scalar_select %p220, %s219, 31
          %s222 = smul.addr %s221, 8
          %s223 = scalar_lea.vmem %s0, %s222
          %s224 = smul.u32 16, %s13
        $region36: #{reinforce_step.1} parent=31 // pred_fallthru
          _
        // Predicated region
        $region37: #{reinforce_step.1} parent=31 // pred_check
          %p225 = pneg %p59
        $region38: #{reinforce_step.1} parent=31 // pred_check_branch
          %227 = sbr.rel (%p225) target = $region40
        $region39: #{reinforce_step.1} parent=31 // pred_region
          %s228 = smul.u32 16, %s13
          %p229 = scmp.lt.s32.totalorder %s228, 31
          %s230 = scalar_select %p229, %s228, 31
          %s231 = smul.addr %s230, 8
          %s232 = scalar_lea.vmem %s1, %s231
          %s233 = smul.u32 16, %s13
        $region40: #{reinforce_step.1} parent=31 // pred_fallthru
          _
      $region32: #{reinforce_step.1} parent=5 // pred_fallthru
        _
      %p234 = scmp.le.s32.totalorder 1, %s13
      %p235 = scmp.lt.s32.totalorder %s13, 3
      %p236 = pnand %p234, %p235
      %p237 = pneg %p236
      // Predicated region
      $region41: #{reinforce_step.1} parent=5 // pred_check
        _
      $region42: #{reinforce_step.1} parent=5 // pred_check_branch
        %239 = sbr.rel (%p236) target = $region44
      $region43: #{reinforce_step.1} parent=5 // pred_region
        %s240 = ssub.s32 %s13, 1
        // Predicated region
        $region45: #{reinforce_step.1} parent=43 // pred_check
          %p241 = pneg %p128
        $region46: #{reinforce_step.1} parent=43 // pred_check_branch
          %243 = sbr.rel (%p241) target = $region48
        $region47: #{reinforce_step.1} parent=43 // pred_region
          %244 = dma.done [#allocation3], 2048
        $region48: #{reinforce_step.1} parent=43 // pred_fallthru
          _
        %s245 = smul.u32 16, %s18
        %p246 = scmp.lt.s32.totalorder %s245, 31
        %s247 = scalar_select %p246, %s245, 31
        %s248 = smul.addr %s247, 8
        %s249 = scalar_lea.vmem %s0, %s248
        %p250 = pneg %p39
        %p251 = pneg %p36
        %s252 = smul.u32 16, %s18
        %p253 = scmp.lt.s32.totalorder %s252, 31
        %s254 = scalar_select %p253, %s252, 31
        %s255 = smul.addr %s254, 8
        %s256 = scalar_lea.vmem %s1, %s255
        %p257 = pneg %p65
        %p258 = pneg %p62
        %p259 = pneg %p86
        %p260 = pneg %p83
        %p261 = pneg %p107
        %p262 = pneg %p104
        %p263 = pneg %p128
        %p264 = pneg %p125
        %p265 = pneg %p149
        %p266 = pneg %p146
        %p267 = pneg %p175
        %p268 = pneg %p172
        %s269 = smul.u32 16, %s18
        %p270 = scmp.lt.s32.totalorder %s269, 31
        %s271 = scalar_select %p270, %s269, 31
        %s272 = smul.addr %s271, 8
        %s273 = scalar_lea.vmem %s6, %s272
        %s274 = smul.u32 16, %s18
        %p275 = scmp.lt.s32.totalorder %s274, 31
        %s276 = scalar_select %p275, %s274, 31
        %s277 = smul.addr %s276, 8
        %s278 = scalar_lea.vmem %s0, %s277
        %s279 = smul.u32 16, %s18
        %s280 = smul.u32 16, %s18
        %p281 = scmp.lt.s32.totalorder %s280, 31
        %s282 = scalar_select %p281, %s280, 31
        %s283 = smul.addr %s282, 8
        %s284 = scalar_lea.vmem %s1, %s283
        %s285 = smul.u32 16, %s18
        %s286 = smul.u32 16, %s18
        %p287 = scmp.lt.s32.totalorder %s286, 31
        %s288 = scalar_select %p287, %s286, 31
        %s289 = smul.addr %s288, 8
        %s290 = scalar_lea.vmem %s6, %s289
        %s291 = smul.u32 16, %s18
        %v293 = vld [vmem:[%s278] sm:$0xff]
        %v294 = vld [vmem:[%s278 + $0x8] sm:$0xff]
        %v295 = vld [vmem:[%s278 + $0x10] sm:$0xff]
        %v296 = vld [vmem:[%s278 + $0x18] sm:$0xff]
        %v297 = vld [vmem:[%s278 + $0x20] sm:$0xff]
        %v298 = vld [vmem:[%s278 + $0x28] sm:$0xff]
        %v299 = vld [vmem:[%s278 + $0x30] sm:$0xff]
        %v300 = vld [vmem:[%s278 + $0x38] sm:$0xff]
        %v301 = vld [vmem:[%s278 + $0x40] sm:$0xff]
        %v302 = vld [vmem:[%s278 + $0x48] sm:$0xff]
        %v303 = vld [vmem:[%s278 + $0x50] sm:$0xff]
        %v304 = vld [vmem:[%s278 + $0x58] sm:$0xff]
        %v305 = vld [vmem:[%s278 + $0x60] sm:$0xff]
        %v306 = vld [vmem:[%s278 + $0x68] sm:$0xff]
        %v307 = vld [vmem:[%s278 + $0x70] sm:$0xff]
        %v308 = vld [vmem:[%s278 + $0x78] sm:$0xff]
        %v309 = vpack.c.bf16 %v294, %v293
        %v310 = vpack.c.bf16 %v296, %v295
        %v311 = vpack.c.bf16 %v298, %v297
        %v312 = vpack.c.bf16 %v300, %v299
        %v313 = vpack.c.bf16 %v302, %v301
        %v314 = vpack.c.bf16 %v304, %v303
        %v315 = vpack.c.bf16 %v306, %v305
        %v316 = vpack.c.bf16 %v308, %v307
        %v317 = vld [vmem:[%s2] sm:$0xff]
        %v318 = vld [vmem:[%s2 + $0x8] sm:$0xff]
        %v319 = vld [vmem:[%s2 + $0x10] sm:$0xff]
        %v320 = vld [vmem:[%s2 + $0x18] sm:$0xff]
        %v321 = vpack.c.bf16 %v318, %v317
        %v322 = vpack.c.bf16 %v320, %v319
        %v323 = vld [vmem:[%s3] sm:$0x1]
        %v325 = vlaneseq
        %v326 = vshrl.u32 %v325, 7
        %v327 = vsub.s32 0, %v326
        %v328 = vrot.slane %v323, %v327
        %vm330 = vcmask 261120
        %v332 = vsel %vm330, %v309, 0
        %v335 = vsel %vm330, %v310, 0
        %v338 = vsel %vm330, %v311, 0
        %v341 = vsel %vm330, %v312, 0
        %v344 = vsel %vm330, %v313, 0
        %v347 = vsel %vm330, %v314, 0
        %v350 = vsel %vm330, %v315, 0
        %v353 = vsel %vm330, %v316, 0
        %355 = vmatprep.subr.bf16.mxu0 0
        %356 = vmatpush1.bf16.msra.mxu0 0
        %357 = vmatprep.subr.bf16.mxu0 0
        %358 = vmatpush1.bf16.msra.mxu0 0
        %359 = vmatprep.subr.bf16.mxu0 0
        %360 = vmatpush1.bf16.msra.mxu0 0
        %361 = vmatprep.subr.bf16.mxu0 0
        %362 = vmatpush1.bf16.msra.mxu0 0
        %363 = vmatprep.subr.bf16.mxu0 0
        %364 = vmatpush1.bf16.msra.mxu0 0
        %365 = vmatprep.subr.bf16.mxu0 0
        %366 = vmatpush1.bf16.msra.mxu0 0
        %367 = vmatprep.subr.bf16.mxu0 0
        %368 = vmatpush1.bf16.msra.mxu0 %v322
        %369 = vmatprep.subr.bf16.mxu0 0
        %370 = vmatpush1.bf16.msra.mxu0 %v321
        %371 = vmatprep.subr.bf16.mxu0 0
        %372 = vmatpush2.bf16.msra.mxu0 0
        %373 = vmatprep.subr.bf16.mxu0 0
        %374 = vmatpush2.bf16.msra.mxu0 0
        %375 = vmatprep.subr.bf16.mxu0 0
        %376 = vmatpush2.bf16.msra.mxu0 0
        %377 = vmatprep.subr.bf16.mxu0 0
        %378 = vmatpush2.bf16.msra.mxu0 0
        %379 = vmatprep.subr.bf16.mxu0 0
        %380 = vmatpush2.bf16.msra.mxu0 0
        %381 = vmatprep.subr.bf16.mxu0 0
        %382 = vmatpush2.bf16.msra.mxu0 0
        %383 = vmatprep.subr.bf16.mxu0 0
        %384 = vmatpush2.bf16.msra.mxu0 0
        %385 = vmatprep.subr.bf16.mxu0 0
        %386 = vmatpush2.bf16.msra.mxu0 0
        %387 = vmatprep.mubr.bf16.mxu0 0
        %388 = vmatmul.mubr.bf16.gmra.mxu0 %v332
        %v389 = vpop.f32.mrf.mxu0
        %v390 = vadd.f32 %v328, %v389
        %v391 = vpop.f32.mrf.mxu0
        %v392 = vpop.f32.mrf.mxu0
        %v393 = vadd.f32 %v328, %v392
        %v394 = vpop.f32.mrf.mxu0
        %395 = vmatprep.mubr.bf16.mxu0 0
        %396 = vmatmul.mubr.bf16.gmra.mxu0 %v335
        %v397 = vpop.f32.mrf.mxu0
        %v398 = vadd.f32 %v328, %v397
        %v399 = vpop.f32.mrf.mxu0
        %v400 = vpop.f32.mrf.mxu0
        %v401 = vadd.f32 %v328, %v400
        %v402 = vpop.f32.mrf.mxu0
        %403 = vmatprep.mubr.bf16.mxu0 0
        %404 = vmatmul.mubr.bf16.gmra.mxu0 %v338
        %v405 = vpop.f32.mrf.mxu0
        %v406 = vadd.f32 %v328, %v405
        %v407 = vpop.f32.mrf.mxu0
        %v408 = vpop.f32.mrf.mxu0
        %v409 = vadd.f32 %v328, %v408
        %v410 = vpop.f32.mrf.mxu0
        %411 = vmatprep.mubr.bf16.mxu0 0
        %412 = vmatmul.mubr.bf16.gmra.mxu0 %v341
        %v413 = vpop.f32.mrf.mxu0
        %v414 = vadd.f32 %v328, %v413
        %v415 = vpop.f32.mrf.mxu0
        %v416 = vpop.f32.mrf.mxu0
        %v417 = vadd.f32 %v328, %v416
        %v418 = vpop.f32.mrf.mxu0
        %419 = vmatprep.mubr.bf16.mxu0 0
        %420 = vmatmul.mubr.bf16.gmra.mxu0 %v344
        %v421 = vpop.f32.mrf.mxu0
        %v422 = vadd.f32 %v328, %v421
        %v423 = vpop.f32.mrf.mxu0
        %v424 = vpop.f32.mrf.mxu0
        %v425 = vadd.f32 %v328, %v424
        %v426 = vpop.f32.mrf.mxu0
        %427 = vmatprep.mubr.bf16.mxu0 0
        %428 = vmatmul.mubr.bf16.gmra.mxu0 %v347
        %v429 = vpop.f32.mrf.mxu0
        %v430 = vadd.f32 %v328, %v429
        %v431 = vpop.f32.mrf.mxu0
        %v432 = vpop.f32.mrf.mxu0
        %v433 = vadd.f32 %v328, %v432
        %v434 = vpop.f32.mrf.mxu0
        %435 = vmatprep.mubr.bf16.mxu0 0
        %436 = vmatmul.mubr.bf16.gmra.mxu0 %v350
        %v437 = vpop.f32.mrf.mxu0
        %v438 = vadd.f32 %v328, %v437
        %v439 = vpop.f32.mrf.mxu0
        %v440 = vpop.f32.mrf.mxu0
        %v441 = vadd.f32 %v328, %v440
        %v442 = vpop.f32.mrf.mxu0
        %443 = vmatprep.mubr.bf16.mxu0 0
        %444 = vmatmul.mubr.bf16.gmra.mxu0 %v353
        %v445 = vpop.f32.mrf.mxu0
        %v446 = vadd.f32 %v328, %v445
        %v447 = vpop.f32.mrf.mxu0
        %v448 = vpop.f32.mrf.mxu0
        %v449 = vadd.f32 %v328, %v448
        %v450 = vpop.f32.mrf.mxu0
        %451 = vdwg.mxu0
        %v452 = vmax.f32 %v390, 0.0
        %v453 = vmax.f32 %v393, 0.0
        %v454 = vmax.f32 %v398, 0.0
        %v455 = vmax.f32 %v401, 0.0
        %v456 = vmax.f32 %v406, 0.0
        %v457 = vmax.f32 %v409, 0.0
        %v458 = vmax.f32 %v414, 0.0
        %v459 = vmax.f32 %v417, 0.0
        %v460 = vmax.f32 %v422, 0.0
        %v461 = vmax.f32 %v425, 0.0
        %v462 = vmax.f32 %v430, 0.0
        %v463 = vmax.f32 %v433, 0.0
        %v464 = vmax.f32 %v438, 0.0
        %v465 = vmax.f32 %v441, 0.0
        %v466 = vmax.f32 %v446, 0.0
        %v467 = vmax.f32 %v449, 0.0
        %v468 = vpack.c.bf16 %v453, %v452
        %v469 = vpack.c.bf16 %v455, %v454
        %v470 = vpack.c.bf16 %v457, %v456
        %v471 = vpack.c.bf16 %v459, %v458
        %v472 = vpack.c.bf16 %v461, %v460
        %v473 = vpack.c.bf16 %v463, %v462
        %v474 = vpack.c.bf16 %v465, %v464
        %v475 = vpack.c.bf16 %v467, %v466
        %v476 = vld [vmem:[#allocation2] sm:$0xff]
        %v477 = vld [vmem:[#allocation2 + $0x8] sm:$0xff]
        %v478 = vld [vmem:[#allocation2 + $0x10] sm:$0xff]
        %v479 = vld [vmem:[#allocation2 + $0x18] sm:$0xff]
        %v480 = vld [vmem:[#allocation2 + $0x20] sm:$0xff]
        %v481 = vld [vmem:[#allocation2 + $0x28] sm:$0xff]
        %v482 = vld [vmem:[#allocation2 + $0x30] sm:$0xff]
        %v483 = vld [vmem:[#allocation2 + $0x38] sm:$0xff]
        %v484 = vld [vmem:[#allocation2 + $0x40] sm:$0xff]
        %v485 = vld [vmem:[#allocation2 + $0x48] sm:$0xff]
        %v486 = vld [vmem:[#allocation2 + $0x50] sm:$0xff]
        %v487 = vld [vmem:[#allocation2 + $0x58] sm:$0xff]
        %v488 = vld [vmem:[#allocation2 + $0x60] sm:$0xff]
        %v489 = vld [vmem:[#allocation2 + $0x68] sm:$0xff]
        %v490 = vld [vmem:[#allocation2 + $0x70] sm:$0xff]
        %v491 = vld [vmem:[#allocation2 + $0x78] sm:$0xff]
        %v492 = vpack.c.bf16 %v477, %v476
        %v493 = vpack.c.bf16 %v479, %v478
        %v494 = vpack.c.bf16 %v481, %v480
        %v495 = vpack.c.bf16 %v483, %v482
        %v496 = vpack.c.bf16 %v485, %v484
        %v497 = vpack.c.bf16 %v487, %v486
        %v498 = vpack.c.bf16 %v489, %v488
        %v499 = vpack.c.bf16 %v491, %v490
        %v500 = vld [vmem:[%s5] sm:$0x1]
        %v502 = vlaneseq
        %v503 = vshrl.u32 %v502, 7
        %v504 = vsub.s32 0, %v503
        %v505 = vrot.slane %v500, %v504
        %507 = vmatprep.subr.bf16.mxu0 0
        %508 = vmatpush1.bf16.msra.mxu0 %v499
        %509 = vmatprep.subr.bf16.mxu0 0
        %510 = vmatpush1.bf16.msra.mxu0 %v498
        %511 = vmatprep.subr.bf16.mxu0 0
        %512 = vmatpush1.bf16.msra.mxu0 %v497
        %513 = vmatprep.subr.bf16.mxu0 0
        %514 = vmatpush1.bf16.msra.mxu0 %v496
        %515 = vmatprep.subr.bf16.mxu0 0
        %516 = vmatpush1.bf16.msra.mxu0 %v495
        %517 = vmatprep.subr.bf16.mxu0 0
        %518 = vmatpush1.bf16.msra.mxu0 %v494
        %519 = vmatprep.subr.bf16.mxu0 0
        %520 = vmatpush1.bf16.msra.mxu0 %v493
        %521 = vmatprep.subr.bf16.mxu0 0
        %522 = vmatpush1.bf16.msra.mxu0 %v492
        %523 = vmatprep.subr.bf16.mxu0 0
        %524 = vmatpush2.bf16.msra.mxu0 0
        %525 = vmatprep.subr.bf16.mxu0 0
        %526 = vmatpush2.bf16.msra.mxu0 0
        %527 = vmatprep.subr.bf16.mxu0 0
        %528 = vmatpush2.bf16.msra.mxu0 0
        %529 = vmatprep.subr.bf16.mxu0 0
        %530 = vmatpush2.bf16.msra.mxu0 0
        %531 = vmatprep.subr.bf16.mxu0 0
        %532 = vmatpush2.bf16.msra.mxu0 0
        %533 = vmatprep.subr.bf16.mxu0 0
        %534 = vmatpush2.bf16.msra.mxu0 0
        %535 = vmatprep.subr.bf16.mxu0 0
        %536 = vmatpush2.bf16.msra.mxu0 0
        %537 = vmatprep.subr.bf16.mxu0 0
        %538 = vmatpush2.bf16.msra.mxu0 0
        %539 = vmatprep.mubr.bf16.mxu0 0
        %540 = vmatmul.mubr.bf16.gmra.mxu0 %v468
        %v541 = vpop.f32.mrf.mxu0
        %v542 = vadd.f32 %v505, %v541
        %v543 = vpop.f32.mrf.mxu0
        %v544 = vpop.f32.mrf.mxu0
        %v545 = vadd.f32 %v505, %v544
        %v546 = vpop.f32.mrf.mxu0
        %547 = vmatprep.mubr.bf16.mxu0 0
        %548 = vmatmul.mubr.bf16.gmra.mxu0 %v469
        %v549 = vpop.f32.mrf.mxu0
        %v550 = vadd.f32 %v505, %v549
        %v551 = vpop.f32.mrf.mxu0
        %v552 = vpop.f32.mrf.mxu0
        %v553 = vadd.f32 %v505, %v552
        %v554 = vpop.f32.mrf.mxu0
        %555 = vmatprep.mubr.bf16.mxu0 0
        %556 = vmatmul.mubr.bf16.gmra.mxu0 %v470
        %v557 = vpop.f32.mrf.mxu0
        %v558 = vadd.f32 %v505, %v557
        %v559 = vpop.f32.mrf.mxu0
        %v560 = vpop.f32.mrf.mxu0
        %v561 = vadd.f32 %v505, %v560
        %v562 = vpop.f32.mrf.mxu0
        %563 = vmatprep.mubr.bf16.mxu0 0
        %564 = vmatmul.mubr.bf16.gmra.mxu0 %v471
        %v565 = vpop.f32.mrf.mxu0
        %v566 = vadd.f32 %v505, %v565
        %v567 = vpop.f32.mrf.mxu0
        %v568 = vpop.f32.mrf.mxu0
        %v569 = vadd.f32 %v505, %v568
        %v570 = vpop.f32.mrf.mxu0
        %571 = vmatprep.mubr.bf16.mxu0 0
        %572 = vmatmul.mubr.bf16.gmra.mxu0 %v472
        %v573 = vpop.f32.mrf.mxu0
        %v574 = vadd.f32 %v505, %v573
        %v575 = vpop.f32.mrf.mxu0
        %v576 = vpop.f32.mrf.mxu0
        %v577 = vadd.f32 %v505, %v576
        %v578 = vpop.f32.mrf.mxu0
        %579 = vmatprep.mubr.bf16.mxu0 0
        %580 = vmatmul.mubr.bf16.gmra.mxu0 %v473
        %v581 = vpop.f32.mrf.mxu0
        %v582 = vadd.f32 %v505, %v581
        %v583 = vpop.f32.mrf.mxu0
        %v584 = vpop.f32.mrf.mxu0
        %v585 = vadd.f32 %v505, %v584
        %v586 = vpop.f32.mrf.mxu0
        %587 = vmatprep.mubr.bf16.mxu0 0
        %588 = vmatmul.mubr.bf16.gmra.mxu0 %v474
        %v589 = vpop.f32.mrf.mxu0
        %v590 = vadd.f32 %v505, %v589
        %v591 = vpop.f32.mrf.mxu0
        %v592 = vpop.f32.mrf.mxu0
        %v593 = vadd.f32 %v505, %v592
        %v594 = vpop.f32.mrf.mxu0
        %595 = vmatprep.mubr.bf16.mxu0 0
        %596 = vmatmul.mubr.bf16.gmra.mxu0 %v475
        %v597 = vpop.f32.mrf.mxu0
        %v598 = vadd.f32 %v505, %v597
        %v599 = vpop.f32.mrf.mxu0
        %v600 = vpop.f32.mrf.mxu0
        %v601 = vadd.f32 %v505, %v600
        %v602 = vpop.f32.mrf.mxu0
        %603 = vdwg.mxu0
        %604 = vmax.xlane.f32.xlu0 %v542
        %v605 = vpop.xlane.xlu0 %604
        %606 = vmax.xlane.f32.xlu0 %v545
        %v607 = vpop.xlane.xlu0 %606
        %608 = vmax.xlane.f32.xlu0 %v550
        %v609 = vpop.xlane.xlu0 %608
        %610 = vmax.xlane.f32.xlu0 %v553
        %v611 = vpop.xlane.xlu0 %610
        %612 = vmax.xlane.f32.xlu0 %v558
        %v613 = vpop.xlane.xlu0 %612
        %614 = vmax.xlane.f32.xlu0 %v561
        %v615 = vpop.xlane.xlu0 %614
        %616 = vmax.xlane.f32.xlu0 %v566
        %v617 = vpop.xlane.xlu0 %616
        %618 = vmax.xlane.f32.xlu0 %v569
        %v619 = vpop.xlane.xlu0 %618
        %620 = vmax.xlane.f32.xlu0 %v574
        %v621 = vpop.xlane.xlu0 %620
        %622 = vmax.xlane.f32.xlu0 %v577
        %v623 = vpop.xlane.xlu0 %622
        %624 = vmax.xlane.f32.xlu0 %v582
        %v625 = vpop.xlane.xlu0 %624
        %626 = vmax.xlane.f32.xlu0 %v585
        %v627 = vpop.xlane.xlu0 %626
        %628 = vmax.xlane.f32.xlu0 %v590
        %v629 = vpop.xlane.xlu0 %628
        %630 = vmax.xlane.f32.xlu0 %v593
        %v631 = vpop.xlane.xlu0 %630
        %632 = vmax.xlane.f32.xlu0 %v598
        %v633 = vpop.xlane.xlu0 %632
        %634 = vmax.xlane.f32.xlu0 %v601
        %v635 = vpop.xlane.xlu0 %634
        %v636 = vsub.f32 %v542, %v605
        %v637 = vsub.f32 %v545, %v607
        %v638 = vsub.f32 %v550, %v609
        %v639 = vsub.f32 %v553, %v611
        %v640 = vsub.f32 %v558, %v613
        %v641 = vsub.f32 %v561, %v615
        %v642 = vsub.f32 %v566, %v617
        %v643 = vsub.f32 %v569, %v619
        %v644 = vsub.f32 %v574, %v621
        %v645 = vsub.f32 %v577, %v623
        %v646 = vsub.f32 %v582, %v625
        %v647 = vsub.f32 %v585, %v627
        %v648 = vsub.f32 %v590, %v629
        %v649 = vsub.f32 %v593, %v631
        %v650 = vsub.f32 %v598, %v633
        %v651 = vsub.f32 %v601, %v635
        %v652 = vmul.f32 %v636, 1.442695
        %v653 = vpow.pop %v652
        %v654 = vmul.f32 %v637, 1.442695
        %v655 = vpow.pop %v654
        %v656 = vmul.f32 %v638, 1.442695
        %v657 = vpow.pop %v656
        %v658 = vmul.f32 %v639, 1.442695
        %v659 = vpow.pop %v658
        %v660 = vmul.f32 %v640, 1.442695
        %v661 = vpow.pop %v660
        %v662 = vmul.f32 %v641, 1.442695
        %v663 = vpow.pop %v662
        %v664 = vmul.f32 %v642, 1.442695
        %v665 = vpow.pop %v664
        %v666 = vmul.f32 %v643, 1.442695
        %v667 = vpow.pop %v666
        %v668 = vmul.f32 %v644, 1.442695
        %v669 = vpow.pop %v668
        %v670 = vmul.f32 %v645, 1.442695
        %v671 = vpow.pop %v670
        %v672 = vmul.f32 %v646, 1.442695
        %v673 = vpow.pop %v672
        %v674 = vmul.f32 %v647, 1.442695
        %v675 = vpow.pop %v674
        %v676 = vmul.f32 %v648, 1.442695
        %v677 = vpow.pop %v676
        %v678 = vmul.f32 %v649, 1.442695
        %v679 = vpow.pop %v678
        %v680 = vmul.f32 %v650, 1.442695
        %v681 = vpow.pop %v680
        %v682 = vmul.f32 %v651, 1.442695
        %v683 = vpow.pop %v682
        %684 = vadd.xlane.f32.xlu0 %v653
        %v685 = vpop.xlane.xlu0 %684
        %686 = vadd.xlane.f32.xlu0 %v655
        %v687 = vpop.xlane.xlu0 %686
        %688 = vadd.xlane.f32.xlu0 %v657
        %v689 = vpop.xlane.xlu0 %688
        %690 = vadd.xlane.f32.xlu0 %v659
        %v691 = vpop.xlane.xlu0 %690
        %692 = vadd.xlane.f32.xlu0 %v661
        %v693 = vpop.xlane.xlu0 %692
        %694 = vadd.xlane.f32.xlu0 %v663
        %v695 = vpop.xlane.xlu0 %694
        %696 = vadd.xlane.f32.xlu0 %v665
        %v697 = vpop.xlane.xlu0 %696
        %698 = vadd.xlane.f32.xlu0 %v667
        %v699 = vpop.xlane.xlu0 %698
        %700 = vadd.xlane.f32.xlu0 %v669
        %v701 = vpop.xlane.xlu0 %700
        %702 = vadd.xlane.f32.xlu0 %v671
        %v703 = vpop.xlane.xlu0 %702
        %704 = vadd.xlane.f32.xlu0 %v673
        %v705 = vpop.xlane.xlu0 %704
        %706 = vadd.xlane.f32.xlu0 %v675
        %v707 = vpop.xlane.xlu0 %706
        %708 = vadd.xlane.f32.xlu0 %v677
        %v709 = vpop.xlane.xlu0 %708
        %710 = vadd.xlane.f32.xlu0 %v679
        %v711 = vpop.xlane.xlu0 %710
        %712 = vadd.xlane.f32.xlu0 %v681
        %v713 = vpop.xlane.xlu0 %712
        %714 = vadd.xlane.f32.xlu0 %v683
        %v715 = vpop.xlane.xlu0 %714
        %v716 = vlog2.pop %v685
        %v717 = vmul.f32 %v716, 0.6931472
        %v718 = vlog2.pop %v687
        %v719 = vmul.f32 %v718, 0.6931472
        %v720 = vlog2.pop %v689
        %v721 = vmul.f32 %v720, 0.6931472
        %v722 = vlog2.pop %v691
        %v723 = vmul.f32 %v722, 0.6931472
        %v724 = vlog2.pop %v693
        %v725 = vmul.f32 %v724, 0.6931472
        %v726 = vlog2.pop %v695
        %v727 = vmul.f32 %v726, 0.6931472
        %v728 = vlog2.pop %v697
        %v729 = vmul.f32 %v728, 0.6931472
        %v730 = vlog2.pop %v699
        %v731 = vmul.f32 %v730, 0.6931472
        %v732 = vlog2.pop %v701
        %v733 = vmul.f32 %v732, 0.6931472
        %v734 = vlog2.pop %v703
        %v735 = vmul.f32 %v734, 0.6931472
        %v736 = vlog2.pop %v705
        %v737 = vmul.f32 %v736, 0.6931472
        %v738 = vlog2.pop %v707
        %v739 = vmul.f32 %v738, 0.6931472
        %v740 = vlog2.pop %v709
        %v741 = vmul.f32 %v740, 0.6931472
        %v742 = vlog2.pop %v711
        %v743 = vmul.f32 %v742, 0.6931472
        %v744 = vlog2.pop %v713
        %v745 = vmul.f32 %v744, 0.6931472
        %v746 = vlog2.pop %v715
        %v747 = vmul.f32 %v746, 0.6931472
        %v748 = vsub.f32 %v636, %v717
        %v749 = vsub.f32 %v637, %v719
        %v750 = vsub.f32 %v638, %v721
        %v751 = vsub.f32 %v639, %v723
        %v752 = vsub.f32 %v640, %v725
        %v753 = vsub.f32 %v641, %v727
        %v754 = vsub.f32 %v642, %v729
        %v755 = vsub.f32 %v643, %v731
        %v756 = vsub.f32 %v644, %v733
        %v757 = vsub.f32 %v645, %v735
        %v758 = vsub.f32 %v646, %v737
        %v759 = vsub.f32 %v647, %v739
        %v760 = vsub.f32 %v648, %v741
        %v761 = vsub.f32 %v649, %v743
        %v762 = vsub.f32 %v650, %v745
        %v763 = vsub.f32 %v651, %v747
        %v764 = vld [vmem:[%s284] sm:$0xff]
        %v765 = vld [vmem:[%s284 + $0x8] sm:$0xff]
        %v766 = vld [vmem:[%s284 + $0x10] sm:$0xff]
        %v767 = vld [vmem:[%s284 + $0x18] sm:$0xff]
        %v768 = vld [vmem:[%s284 + $0x20] sm:$0xff]
        %v769 = vld [vmem:[%s284 + $0x28] sm:$0xff]
        %v770 = vld [vmem:[%s284 + $0x30] sm:$0xff]
        %v771 = vld [vmem:[%s284 + $0x38] sm:$0xff]
        %v772 = vld [vmem:[%s284 + $0x40] sm:$0xff]
        %v773 = vld [vmem:[%s284 + $0x48] sm:$0xff]
        %v774 = vld [vmem:[%s284 + $0x50] sm:$0xff]
        %v775 = vld [vmem:[%s284 + $0x58] sm:$0xff]
        %v776 = vld [vmem:[%s284 + $0x60] sm:$0xff]
        %v777 = vld [vmem:[%s284 + $0x68] sm:$0xff]
        %v778 = vld [vmem:[%s284 + $0x70] sm:$0xff]
        %v779 = vld [vmem:[%s284 + $0x78] sm:$0xff]
        %v780 = vadd.f32 %v636, %v764
        %v781 = vadd.f32 %v637, %v765
        %v782 = vadd.f32 %v638, %v766
        %v783 = vadd.f32 %v639, %v767
        %v784 = vadd.f32 %v640, %v768
        %v785 = vadd.f32 %v641, %v769
        %v786 = vadd.f32 %v642, %v770
        %v787 = vadd.f32 %v643, %v771
        %v788 = vadd.f32 %v644, %v772
        %v789 = vadd.f32 %v645, %v773
        %v790 = vadd.f32 %v646, %v774
        %v791 = vadd.f32 %v647, %v775
        %v792 = vadd.f32 %v648, %v776
        %v793 = vadd.f32 %v649, %v777
        %v794 = vadd.f32 %v650, %v778
        %v795 = vadd.f32 %v651, %v779
        %796 = vmax.xlane.f32.xlu0 %v780
        %v797 = vpop.xlane.xlu0 %796
        %798 = vmax.xlane.f32.xlu0 %v781
        %v799 = vpop.xlane.xlu0 %798
        %800 = vmax.xlane.f32.xlu0 %v782
        %v801 = vpop.xlane.xlu0 %800
        %802 = vmax.xlane.f32.xlu0 %v783
        %v803 = vpop.xlane.xlu0 %802
        %804 = vmax.xlane.f32.xlu0 %v784
        %v805 = vpop.xlane.xlu0 %804
        %806 = vmax.xlane.f32.xlu0 %v785
        %v807 = vpop.xlane.xlu0 %806
        %808 = vmax.xlane.f32.xlu0 %v786
        %v809 = vpop.xlane.xlu0 %808
        %810 = vmax.xlane.f32.xlu0 %v787
        %v811 = vpop.xlane.xlu0 %810
        %812 = vmax.xlane.f32.xlu0 %v788
        %v813 = vpop.xlane.xlu0 %812
        %814 = vmax.xlane.f32.xlu0 %v789
        %v815 = vpop.xlane.xlu0 %814
        %816 = vmax.xlane.f32.xlu0 %v790
        %v817 = vpop.xlane.xlu0 %816
        %818 = vmax.xlane.f32.xlu0 %v791
        %v819 = vpop.xlane.xlu0 %818
        %820 = vmax.xlane.f32.xlu0 %v792
        %v821 = vpop.xlane.xlu0 %820
        %822 = vmax.xlane.f32.xlu0 %v793
        %v823 = vpop.xlane.xlu0 %822
        %824 = vmax.xlane.f32.xlu0 %v794
        %v825 = vpop.xlane.xlu0 %824
        %826 = vmax.xlane.f32.xlu0 %v795
        %v827 = vpop.xlane.xlu0 %826
        %v828 = vlaneseq
        %v829 = vand.u32 %v828, 127
        %vm830 = vcmp.eq.f32.partialorder %v780, %v797
        %vm831 = vcmp.eq.f32.partialorder %v781, %v799
        %vm832 = vcmp.eq.f32.partialorder %v782, %v801
        %vm833 = vcmp.eq.f32.partialorder %v783, %v803
        %vm834 = vcmp.eq.f32.partialorder %v784, %v805
        %vm835 = vcmp.eq.f32.partialorder %v785, %v807
        %vm836 = vcmp.eq.f32.partialorder %v786, %v809
        %vm837 = vcmp.eq.f32.partialorder %v787, %v811
        %vm838 = vcmp.eq.f32.partialorder %v788, %v813
        %vm839 = vcmp.eq.f32.partialorder %v789, %v815
        %vm840 = vcmp.eq.f32.partialorder %v790, %v817
        %vm841 = vcmp.eq.f32.partialorder %v791, %v819
        %vm842 = vcmp.eq.f32.partialorder %v792, %v821
        %vm843 = vcmp.eq.f32.partialorder %v793, %v823
        %vm844 = vcmp.eq.f32.partialorder %v794, %v825
        %vm845 = vcmp.eq.f32.partialorder %v795, %v827
        %v846 = vsel %vm830, %v829, 128
        %v847 = vsel %vm831, %v829, 128
        %v848 = vsel %vm832, %v829, 128
        %v849 = vsel %vm833, %v829, 128
        %v850 = vsel %vm834, %v829, 128
        %v851 = vsel %vm835, %v829, 128
        %v852 = vsel %vm836, %v829, 128
        %v853 = vsel %vm837, %v829, 128
        %v854 = vsel %vm838, %v829, 128
        %v855 = vsel %vm839, %v829, 128
        %v856 = vsel %vm840, %v829, 128
        %v857 = vsel %vm841, %v829, 128
        %v858 = vsel %vm842, %v829, 128
        %v859 = vsel %vm843, %v829, 128
        %v860 = vsel %vm844, %v829, 128
        %v861 = vsel %vm845, %v829, 128
        %v862 = vand.u32 %v846, 65535
        %v863 = vshra.s32 %v846, 16
        %v864 = vcvt.s32.f32 %v862
        %v865 = vcvt.s32.f32 %v863
        %866 = vmin.xlane.f32.xlu0 %v865
        %v867 = vpop.xlane.xlu0 %866
        %vm868 = vcmp.eq.f32.partialorder %v865, %v867
        %v869 = vsel %vm868, %v864, inf
        %870 = vmin.xlane.f32.xlu0 %v869
        %v871 = vpop.xlane.xlu0 %870
        %v872 = vcvt.f32.s32 %v871
        %v873 = vcvt.f32.s32 %v867
        %v874 = vshll.u32 %v873, 16
        %v875 = vadd.s32 %v874, %v872
        %v876 = vand.u32 %v847, 65535
        %v877 = vshra.s32 %v847, 16
        %v878 = vcvt.s32.f32 %v876
        %v879 = vcvt.s32.f32 %v877
        %880 = vmin.xlane.f32.xlu0 %v879
        %v881 = vpop.xlane.xlu0 %880
        %vm882 = vcmp.eq.f32.partialorder %v879, %v881
        %v883 = vsel %vm882, %v878, inf
        %884 = vmin.xlane.f32.xlu0 %v883
        %v885 = vpop.xlane.xlu0 %884
        %v886 = vcvt.f32.s32 %v885
        %v887 = vcvt.f32.s32 %v881
        %v888 = vshll.u32 %v887, 16
        %v889 = vadd.s32 %v888, %v886
        %v890 = vand.u32 %v848, 65535
        %v891 = vshra.s32 %v848, 16
        %v892 = vcvt.s32.f32 %v890
        %v893 = vcvt.s32.f32 %v891
        %894 = vmin.xlane.f32.xlu0 %v893
        %v895 = vpop.xlane.xlu0 %894
        %vm896 = vcmp.eq.f32.partialorder %v893, %v895
        %v897 = vsel %vm896, %v892, inf
        %898 = vmin.xlane.f32.xlu0 %v897
        %v899 = vpop.xlane.xlu0 %898
        %v900 = vcvt.f32.s32 %v899
        %v901 = vcvt.f32.s32 %v895
        %v902 = vshll.u32 %v901, 16
        %v903 = vadd.s32 %v902, %v900
        %v904 = vand.u32 %v849, 65535
        %v905 = vshra.s32 %v849, 16
        %v906 = vcvt.s32.f32 %v904
        %v907 = vcvt.s32.f32 %v905
        %908 = vmin.xlane.f32.xlu0 %v907
        %v909 = vpop.xlane.xlu0 %908
        %vm910 = vcmp.eq.f32.partialorder %v907, %v909
        %v911 = vsel %vm910, %v906, inf
        %912 = vmin.xlane.f32.xlu0 %v911
        %v913 = vpop.xlane.xlu0 %912
        %v914 = vcvt.f32.s32 %v913
        %v915 = vcvt.f32.s32 %v909
        %v916 = vshll.u32 %v915, 16
        %v917 = vadd.s32 %v916, %v914
        %v918 = vand.u32 %v850, 65535
        %v919 = vshra.s32 %v850, 16
        %v920 = vcvt.s32.f32 %v918
        %v921 = vcvt.s32.f32 %v919
        %922 = vmin.xlane.f32.xlu0 %v921
        %v923 = vpop.xlane.xlu0 %922
        %vm924 = vcmp.eq.f32.partialorder %v921, %v923
        %v925 = vsel %vm924, %v920, inf
        %926 = vmin.xlane.f32.xlu0 %v925
        %v927 = vpop.xlane.xlu0 %926
        %v928 = vcvt.f32.s32 %v927
        %v929 = vcvt.f32.s32 %v923
        %v930 = vshll.u32 %v929, 16
        %v931 = vadd.s32 %v930, %v928
        %v932 = vand.u32 %v851, 65535
        %v933 = vshra.s32 %v851, 16
        %v934 = vcvt.s32.f32 %v932
        %v935 = vcvt.s32.f32 %v933
        %936 = vmin.xlane.f32.xlu0 %v935
        %v937 = vpop.xlane.xlu0 %936
        %vm938 = vcmp.eq.f32.partialorder %v935, %v937
        %v939 = vsel %vm938, %v934, inf
        %940 = vmin.xlane.f32.xlu0 %v939
        %v941 = vpop.xlane.xlu0 %940
        %v942 = vcvt.f32.s32 %v941
        %v943 = vcvt.f32.s32 %v937
        %v944 = vshll.u32 %v943, 16
        %v945 = vadd.s32 %v944, %v942
        %v946 = vand.u32 %v852, 65535
        %v947 = vshra.s32 %v852, 16
        %v948 = vcvt.s32.f32 %v946
        %v949 = vcvt.s32.f32 %v947
        %950 = vmin.xlane.f32.xlu0 %v949
        %v951 = vpop.xlane.xlu0 %950
        %vm952 = vcmp.eq.f32.partialorder %v949, %v951
        %v953 = vsel %vm952, %v948, inf
        %954 = vmin.xlane.f32.xlu0 %v953
        %v955 = vpop.xlane.xlu0 %954
        %v956 = vcvt.f32.s32 %v955
        %v957 = vcvt.f32.s32 %v951
        %v958 = vshll.u32 %v957, 16
        %v959 = vadd.s32 %v958, %v956
        %v960 = vand.u32 %v853, 65535
        %v961 = vshra.s32 %v853, 16
        %v962 = vcvt.s32.f32 %v960
        %v963 = vcvt.s32.f32 %v961
        %964 = vmin.xlane.f32.xlu0 %v963
        %v965 = vpop.xlane.xlu0 %964
        %vm966 = vcmp.eq.f32.partialorder %v963, %v965
        %v967 = vsel %vm966, %v962, inf
        %968 = vmin.xlane.f32.xlu0 %v967
        %v969 = vpop.xlane.xlu0 %968
        %v970 = vcvt.f32.s32 %v969
        %v971 = vcvt.f32.s32 %v965
        %v972 = vshll.u32 %v971, 16
        %v973 = vadd.s32 %v972, %v970
        %v974 = vand.u32 %v854, 65535
        %v975 = vshra.s32 %v854, 16
        %v976 = vcvt.s32.f32 %v974
        %v977 = vcvt.s32.f32 %v975
        %978 = vmin.xlane.f32.xlu0 %v977
        %v979 = vpop.xlane.xlu0 %978
        %vm980 = vcmp.eq.f32.partialorder %v977, %v979
        %v981 = vsel %vm980, %v976, inf
        %982 = vmin.xlane.f32.xlu0 %v981
        %v983 = vpop.xlane.xlu0 %982
        %v984 = vcvt.f32.s32 %v983
        %v985 = vcvt.f32.s32 %v979
        %v986 = vshll.u32 %v985, 16
        %v987 = vadd.s32 %v986, %v984
        %v988 = vand.u32 %v855, 65535
        %v989 = vshra.s32 %v855, 16
        %v990 = vcvt.s32.f32 %v988
        %v991 = vcvt.s32.f32 %v989
        %992 = vmin.xlane.f32.xlu0 %v991
        %v993 = vpop.xlane.xlu0 %992
        %vm994 = vcmp.eq.f32.partialorder %v991, %v993
        %v995 = vsel %vm994, %v990, inf
        %996 = vmin.xlane.f32.xlu0 %v995
        %v997 = vpop.xlane.xlu0 %996
        %v998 = vcvt.f32.s32 %v997
        %v999 = vcvt.f32.s32 %v993
        %v1000 = vshll.u32 %v999, 16
        %v1001 = vadd.s32 %v1000, %v998
        %v1002 = vand.u32 %v856, 65535
        %v1003 = vshra.s32 %v856, 16
        %v1004 = vcvt.s32.f32 %v1002
        %v1005 = vcvt.s32.f32 %v1003
        %1006 = vmin.xlane.f32.xlu0 %v1005
        %v1007 = vpop.xlane.xlu0 %1006
        %vm1008 = vcmp.eq.f32.partialorder %v1005, %v1007
        %v1009 = vsel %vm1008, %v1004, inf
        %1010 = vmin.xlane.f32.xlu0 %v1009
        %v1011 = vpop.xlane.xlu0 %1010
        %v1012 = vcvt.f32.s32 %v1011
        %v1013 = vcvt.f32.s32 %v1007
        %v1014 = vshll.u32 %v1013, 16
        %v1015 = vadd.s32 %v1014, %v1012
        %v1016 = vand.u32 %v857, 65535
        %v1017 = vshra.s32 %v857, 16
        %v1018 = vcvt.s32.f32 %v1016
        %v1019 = vcvt.s32.f32 %v1017
        %1020 = vmin.xlane.f32.xlu0 %v1019
        %v1021 = vpop.xlane.xlu0 %1020
        %vm1022 = vcmp.eq.f32.partialorder %v1019, %v1021
        %v1023 = vsel %vm1022, %v1018, inf
        %1024 = vmin.xlane.f32.xlu0 %v1023
        %v1025 = vpop.xlane.xlu0 %1024
        %v1026 = vcvt.f32.s32 %v1025
        %v1027 = vcvt.f32.s32 %v1021
        %v1028 = vshll.u32 %v1027, 16
        %v1029 = vadd.s32 %v1028, %v1026
        %v1030 = vand.u32 %v858, 65535
        %v1031 = vshra.s32 %v858, 16
        %v1032 = vcvt.s32.f32 %v1030
        %v1033 = vcvt.s32.f32 %v1031
        %1034 = vmin.xlane.f32.xlu0 %v1033
        %v1035 = vpop.xlane.xlu0 %1034
        %vm1036 = vcmp.eq.f32.partialorder %v1033, %v1035
        %v1037 = vsel %vm1036, %v1032, inf
        %1038 = vmin.xlane.f32.xlu0 %v1037
        %v1039 = vpop.xlane.xlu0 %1038
        %v1040 = vcvt.f32.s32 %v1039
        %v1041 = vcvt.f32.s32 %v1035
        %v1042 = vshll.u32 %v1041, 16
        %v1043 = vadd.s32 %v1042, %v1040
        %v1044 = vand.u32 %v859, 65535
        %v1045 = vshra.s32 %v859, 16
        %v1046 = vcvt.s32.f32 %v1044
        %v1047 = vcvt.s32.f32 %v1045
        %1048 = vmin.xlane.f32.xlu0 %v1047
        %v1049 = vpop.xlane.xlu0 %1048
        %vm1050 = vcmp.eq.f32.partialorder %v1047, %v1049
        %v1051 = vsel %vm1050, %v1046, inf
        %1052 = vmin.xlane.f32.xlu0 %v1051
        %v1053 = vpop.xlane.xlu0 %1052
        %v1054 = vcvt.f32.s32 %v1053
        %v1055 = vcvt.f32.s32 %v1049
        %v1056 = vshll.u32 %v1055, 16
        %v1057 = vadd.s32 %v1056, %v1054
        %v1058 = vand.u32 %v860, 65535
        %v1059 = vshra.s32 %v860, 16
        %v1060 = vcvt.s32.f32 %v1058
        %v1061 = vcvt.s32.f32 %v1059
        %1062 = vmin.xlane.f32.xlu0 %v1061
        %v1063 = vpop.xlane.xlu0 %1062
        %vm1064 = vcmp.eq.f32.partialorder %v1061, %v1063
        %v1065 = vsel %vm1064, %v1060, inf
        %1066 = vmin.xlane.f32.xlu0 %v1065
        %v1067 = vpop.xlane.xlu0 %1066
        %v1068 = vcvt.f32.s32 %v1067
        %v1069 = vcvt.f32.s32 %v1063
        %v1070 = vshll.u32 %v1069, 16
        %v1071 = vadd.s32 %v1070, %v1068
        %v1072 = vand.u32 %v861, 65535
        %v1073 = vshra.s32 %v861, 16
        %v1074 = vcvt.s32.f32 %v1072
        %v1075 = vcvt.s32.f32 %v1073
        %1076 = vmin.xlane.f32.xlu0 %v1075
        %v1077 = vpop.xlane.xlu0 %1076
        %vm1078 = vcmp.eq.f32.partialorder %v1075, %v1077
        %v1079 = vsel %vm1078, %v1074, inf
        %1080 = vmin.xlane.f32.xlu0 %v1079
        %v1081 = vpop.xlane.xlu0 %1080
        %v1082 = vcvt.f32.s32 %v1081
        %v1083 = vcvt.f32.s32 %v1077
        %v1084 = vshll.u32 %v1083, 16
        %v1085 = vadd.s32 %v1084, %v1082
        %vm1086 = vcmp.eq.s32.totalorder %v829, %v875
        %vm1087 = vcmp.eq.s32.totalorder %v829, %v889
        %vm1088 = vcmp.eq.s32.totalorder %v829, %v903
        %vm1089 = vcmp.eq.s32.totalorder %v829, %v917
        %vm1090 = vcmp.eq.s32.totalorder %v829, %v931
        %vm1091 = vcmp.eq.s32.totalorder %v829, %v945
        %vm1092 = vcmp.eq.s32.totalorder %v829, %v959
        %vm1093 = vcmp.eq.s32.totalorder %v829, %v973
        %vm1094 = vcmp.eq.s32.totalorder %v829, %v987
        %vm1095 = vcmp.eq.s32.totalorder %v829, %v1001
        %vm1096 = vcmp.eq.s32.totalorder %v829, %v1015
        %vm1097 = vcmp.eq.s32.totalorder %v829, %v1029
        %vm1098 = vcmp.eq.s32.totalorder %v829, %v1043
        %vm1099 = vcmp.eq.s32.totalorder %v829, %v1057
        %vm1100 = vcmp.eq.s32.totalorder %v829, %v1071
        %vm1101 = vcmp.eq.s32.totalorder %v829, %v1085
        %v1102 = vsel %vm1086, %v748, 0.0
        %v1103 = vsel %vm1087, %v749, 0.0
        %v1104 = vsel %vm1088, %v750, 0.0
        %v1105 = vsel %vm1089, %v751, 0.0
        %v1106 = vsel %vm1090, %v752, 0.0
        %v1107 = vsel %vm1091, %v753, 0.0
        %v1108 = vsel %vm1092, %v754, 0.0
        %v1109 = vsel %vm1093, %v755, 0.0
        %v1110 = vsel %vm1094, %v756, 0.0
        %v1111 = vsel %vm1095, %v757, 0.0
        %v1112 = vsel %vm1096, %v758, 0.0
        %v1113 = vsel %vm1097, %v759, 0.0
        %v1114 = vsel %vm1098, %v760, 0.0
        %v1115 = vsel %vm1099, %v761, 0.0
        %v1116 = vsel %vm1100, %v762, 0.0
        %v1117 = vsel %vm1101, %v763, 0.0
        %1118 = vadd.xlane.f32.xlu0 %v1102
        %v1119 = vpop.xlane.xlu0 %1118
        %1120 = vadd.xlane.f32.xlu0 %v1103
        %v1121 = vpop.xlane.xlu0 %1120
        %1122 = vadd.xlane.f32.xlu0 %v1104
        %v1123 = vpop.xlane.xlu0 %1122
        %1124 = vadd.xlane.f32.xlu0 %v1105
        %v1125 = vpop.xlane.xlu0 %1124
        %1126 = vadd.xlane.f32.xlu0 %v1106
        %v1127 = vpop.xlane.xlu0 %1126
        %1128 = vadd.xlane.f32.xlu0 %v1107
        %v1129 = vpop.xlane.xlu0 %1128
        %1130 = vadd.xlane.f32.xlu0 %v1108
        %v1131 = vpop.xlane.xlu0 %1130
        %1132 = vadd.xlane.f32.xlu0 %v1109
        %v1133 = vpop.xlane.xlu0 %1132
        %1134 = vadd.xlane.f32.xlu0 %v1110
        %v1135 = vpop.xlane.xlu0 %1134
        %1136 = vadd.xlane.f32.xlu0 %v1111
        %v1137 = vpop.xlane.xlu0 %1136
        %1138 = vadd.xlane.f32.xlu0 %v1112
        %v1139 = vpop.xlane.xlu0 %1138
        %1140 = vadd.xlane.f32.xlu0 %v1113
        %v1141 = vpop.xlane.xlu0 %1140
        %1142 = vadd.xlane.f32.xlu0 %v1114
        %v1143 = vpop.xlane.xlu0 %1142
        %1144 = vadd.xlane.f32.xlu0 %v1115
        %v1145 = vpop.xlane.xlu0 %1144
        %1146 = vadd.xlane.f32.xlu0 %v1116
        %v1147 = vpop.xlane.xlu0 %1146
        %1148 = vadd.xlane.f32.xlu0 %v1117
        %v1149 = vpop.xlane.xlu0 %1148
        %v1150 = vcvt.s32.f32 %v875
        %v1151 = vcvt.s32.f32 %v889
        %v1152 = vcvt.s32.f32 %v903
        %v1153 = vcvt.s32.f32 %v917
        %v1154 = vcvt.s32.f32 %v931
        %v1155 = vcvt.s32.f32 %v945
        %v1156 = vcvt.s32.f32 %v959
        %v1157 = vcvt.s32.f32 %v973
        %v1158 = vcvt.s32.f32 %v987
        %v1159 = vcvt.s32.f32 %v1001
        %v1160 = vcvt.s32.f32 %v1015
        %v1161 = vcvt.s32.f32 %v1029
        %v1162 = vcvt.s32.f32 %v1043
        %v1163 = vcvt.s32.f32 %v1057
        %v1164 = vcvt.s32.f32 %v1071
        %v1165 = vcvt.s32.f32 %v1085
        %vm1166 = vcmask 7168
        %1167 = vst.msk [vmem:[%s290] sm:$0xff] %vm1166, %v1150
        %1168 = vst.msk [vmem:[%s290 + $0x8] sm:$0xff] %vm1166, %v1151
        %1169 = vst.msk [vmem:[%s290 + $0x10] sm:$0xff] %vm1166, %v1152
        %1170 = vst.msk [vmem:[%s290 + $0x18] sm:$0xff] %vm1166, %v1153
        %1171 = vst.msk [vmem:[%s290 + $0x20] sm:$0xff] %vm1166, %v1154
        %1172 = vst.msk [vmem:[%s290 + $0x28] sm:$0xff] %vm1166, %v1155
        %1173 = vst.msk [vmem:[%s290 + $0x30] sm:$0xff] %vm1166, %v1156
        %1174 = vst.msk [vmem:[%s290 + $0x38] sm:$0xff] %vm1166, %v1157
        %1175 = vst.msk [vmem:[%s290 + $0x40] sm:$0xff] %vm1166, %v1158
        %1176 = vst.msk [vmem:[%s290 + $0x48] sm:$0xff] %vm1166, %v1159
        %1177 = vst.msk [vmem:[%s290 + $0x50] sm:$0xff] %vm1166, %v1160
        %1178 = vst.msk [vmem:[%s290 + $0x58] sm:$0xff] %vm1166, %v1161
        %1179 = vst.msk [vmem:[%s290 + $0x60] sm:$0xff] %vm1166, %v1162
        %1180 = vst.msk [vmem:[%s290 + $0x68] sm:$0xff] %vm1166, %v1163
        %1181 = vst.msk [vmem:[%s290 + $0x70] sm:$0xff] %vm1166, %v1164
        %1182 = vst.msk [vmem:[%s290 + $0x78] sm:$0xff] %vm1166, %v1165
        %vm1183 = vcmask 15368
        %1184 = vst.msk [vmem:[%s290] sm:$0xff] %vm1183, %v1119
        %1185 = vst.msk [vmem:[%s290 + $0x8] sm:$0xff] %vm1183, %v1121
        %1186 = vst.msk [vmem:[%s290 + $0x10] sm:$0xff] %vm1183, %v1123
        %1187 = vst.msk [vmem:[%s290 + $0x18] sm:$0xff] %vm1183, %v1125
        %1188 = vst.msk [vmem:[%s290 + $0x20] sm:$0xff] %vm1183, %v1127
        %1189 = vst.msk [vmem:[%s290 + $0x28] sm:$0xff] %vm1183, %v1129
        %1190 = vst.msk [vmem:[%s290 + $0x30] sm:$0xff] %vm1183, %v1131
        %1191 = vst.msk [vmem:[%s290 + $0x38] sm:$0xff] %vm1183, %v1133
        %1192 = vst.msk [vmem:[%s290 + $0x40] sm:$0xff] %vm1183, %v1135
        %1193 = vst.msk [vmem:[%s290 + $0x48] sm:$0xff] %vm1183, %v1137
        %1194 = vst.msk [vmem:[%s290 + $0x50] sm:$0xff] %vm1183, %v1139
        %1195 = vst.msk [vmem:[%s290 + $0x58] sm:$0xff] %vm1183, %v1141
        %1196 = vst.msk [vmem:[%s290 + $0x60] sm:$0xff] %vm1183, %v1143
        %1197 = vst.msk [vmem:[%s290 + $0x68] sm:$0xff] %vm1183, %v1145
        %1198 = vst.msk [vmem:[%s290 + $0x70] sm:$0xff] %vm1183, %v1147
        %1199 = vst.msk [vmem:[%s290 + $0x78] sm:$0xff] %vm1183, %v1149
        %s1200 = smul.u32 16, %s18
        %p1201 = scmp.lt.s32.totalorder %s1200, 31
        %s1202 = scalar_select %p1201, %s1200, 31
        %s1203 = smul.addr %s1202, 8
        %s1204 = scalar_lea.vmem %s6, %s1203
        // Predicated region
        $region49: #{reinforce_step.1} parent=43 // pred_check
          %p1205 = pneg %p172
        $region50: #{reinforce_step.1} parent=43 // pred_check_branch
          %1207 = sbr.rel (%p1205) target = $region52
        $region51: #{reinforce_step.1} parent=43 // pred_region
          %s1208 = smul.u32 16, %s18
        $region52: #{reinforce_step.1} parent=43 // pred_fallthru
          _
      $region44: #{reinforce_step.1} parent=5 // pred_fallthru
        _
      %p1209 = scmp.le.s32.totalorder 2, %s13
      // Predicated region
      $region53: #{reinforce_step.1} parent=5 // pred_check
        %p1210 = pneg %p1209
      $region54: #{reinforce_step.1} parent=5 // pred_check_branch
        %1212 = sbr.rel (%p1210) target = $region56
      $region55: #{reinforce_step.1} parent=5 // pred_region
        %s1213 = ssub.s32 %s13, 2
        // Predicated region
        $region57: #{reinforce_step.1} parent=55 // pred_check
          %p1214 = pneg %p178
        $region58: #{reinforce_step.1} parent=55 // pred_check_branch
          %1216 = sbr.rel (%p1214) target = $region60
        $region59: #{reinforce_step.1} parent=55 // pred_region
          %s1217 = smul.u32 16, %s19
          %p1218 = scmp.lt.s32.totalorder %s1217, 31
          %s1219 = scalar_select %p1218, %s1217, 31
          %s1220 = smul.addr %s1219, 8
          %s1221 = scalar_lea.vmem %s6, %s1220
        $region60: #{reinforce_step.1} parent=55 // pred_fallthru
          _
      $region56: #{reinforce_step.1} parent=5 // pred_fallthru
        _
    $region6: #{reinforce_step.1} parent=1 // loop_footer
      %s17 = sadd.s32 1, %s13
    $region7: #{reinforce_step.1} parent=1 // loop_footer_branch
      %12 = sbr.rel target = $region3
    $region8: #{reinforce_step.1} parent=1 // loop_exit
      _
    %1222 = vsyncpa [#allocation3], 1
    %s1223 = scalar_lea.sflag [#allocation3], 1
    %1224 = vsyncpa %s1223, 1

</llo_original>
